<compile_context>
chip_gen: v7x
topology: tpu7x:2x2x1
jax: 0.10.0
libtpu: 0.0.40
codegen_flags: <defaults>
</compile_context>

<pallas_src>
import functools

import jax
import jax.numpy as jnp
from jax.experimental import pallas as pl
from jax.experimental.pallas import tpu as pltpu


# --------------------------------------------------------------------------- #
# Kernels
# --------------------------------------------------------------------------- #
def _sam_kernel_fused(fy_ref, x_ref, w12_ref, b12_ref, w3_ref, b3_ref,
                      y_ref, img_ref, *, C):
    """conv1/conv2 fused into a single MXU call (requires C % 8 == 0)."""
    fy = fy_ref[0]                                     # (C, T), native dtype
    x = x_ref[0]                                       # (3, T), native dtype
    f32 = jnp.float32

    # Fused conv1+conv2: (C+3, C) @ (C, T) -> (C+3, T), f32 accumulation on MXU.
    y12 = jnp.dot(w12_ref[...], fy, preferred_element_type=f32) + b12_ref[...]
    y1 = y12[:C]                                       # conv1(fy), f32
    img_f32 = y12[C:] + x.astype(f32)                  # conv2(fy) + x, stays f32

    # sigmoid(conv3(img)); sigmoid runs on the EUP, matmul K=3 is tiny.
    y2 = jax.nn.sigmoid(
        jnp.dot(w3_ref[...], img_f32, preferred_element_type=f32) + b3_ref[...])

    y_ref[0] = (y1 * y2).astype(y_ref.dtype) + fy      # y = y1*y2 + fy
    img_ref[0] = img_f32.astype(img_ref.dtype)         # single cast of img


def _sam_kernel(fy_ref, x_ref, w1_ref, b1_ref, w2_ref, b2_ref, w3_ref, b3_ref,
                y_ref, img_ref):
    """Unfused fallback for C % 8 != 0 (sublane slice would be unaligned)."""
    fy = fy_ref[0]                                     # (C, T), native dtype
    x = x_ref[0]                                       # (3, T), native dtype
    f32 = jnp.float32

    y1 = jnp.dot(w1_ref[...], fy, preferred_element_type=f32) + b1_ref[...]
    img_f32 = (jnp.dot(w2_ref[...], fy, preferred_element_type=f32)
               + b2_ref[...] + x.astype(f32))
    y2 = jax.nn.sigmoid(
        jnp.dot(w3_ref[...], img_f32, preferred_element_type=f32) + b3_ref[...])

    y_ref[0] = (y1 * y2).astype(y_ref.dtype) + fy
    img_ref[0] = img_f32.astype(img_ref.dtype)


# --------------------------------------------------------------------------- #
# Generation-aware tile selection
# --------------------------------------------------------------------------- #
def _vmem_capacity_bytes() -> int:
    try:
        info = pltpu.get_tpu_info()
        for attr in ("vmem_capacity_bytes", "vmem_size_bytes", "vmem_bytes"):
            v = getattr(info, attr, None)
            if v:
                return int(v)
    except Exception:
        pass
    return 64 * 1024 * 1024  # conservative fallback: v7x physical VMEM


def _step_vmem_bytes(t: int, C: int, itemsize: int) -> int:
    # Double-buffered fy/x input blocks and y/img output blocks ...
    blocks = 2 * 2 * (C + 3) * t * itemsize
    # ... plus f32 intermediates (y12 / y1, img_f32, y2, products).
    interm = (3 * C + 12) * t * 4
    return blocks + interm


_LANE_TILE_CANDIDATES = (16384, 8192, 4096, 2048, 1024, 512, 256, 128)


def _pick_lane_tile(hw_pad: int, C: int, itemsize: int, budget: int) -> int:
    """hw_pad is a multiple of 128.  Picks the largest VMEM-safe lane tile."""
    fitting = [t for t in _LANE_TILE_CANDIDATES
               if t <= hw_pad and _step_vmem_bytes(t, C, itemsize) <= budget]
    if not fitting:
        return 128
    exact = [t for t in fitting if hw_pad % t == 0]     # 128 always divides
    best_exact = exact[0] if exact else 128
    if best_exact >= 2048:
        return best_exact
    # Accept zero-padding up to ~12.5% extra traffic to reach a larger tile.
    for t in fitting:
        if ((-hw_pad) % t) * 8 <= hw_pad:
            return t
    return best_exact


# --------------------------------------------------------------------------- #
# Wrapper
# --------------------------------------------------------------------------- #
def supervised_attention_module(fy, x, w1, b1, w2, b2, w3, b3, *, lane_tile=None):
    """SAM forward (kernel_size=1).

    fy: (B, C, H, W) previous-stage features; x: (B, 3, H, W) step input.
    w1: (C, C), w2: (3, C), w3: (C, 3) in PyTorch (out_ch, in_ch) layout.
    Returns (y, img): y (B, C, H, W), img (B, 3, H, W).
    """
    B, C, H, W = fy.shape
    assert x.shape == (B, 3, H, W), "x must be a 3-channel image batch"
    HW = H * W
    f32 = jnp.float32
    cdt = fy.dtype                              # matmul input dtype for conv1/conv2
    itemsize = jnp.dtype(fy.dtype).itemsize

    # Generation-aware VMEM budget (v5e/v6e: 128 MiB, v7x: 64 MiB physical).
    vmem_budget = int(_vmem_capacity_bytes() * 0.7)

    hw128 = -(-HW // 128) * 128                 # lane-dense: pad to 128 multiple
    if lane_tile is not None:
        assert lane_tile % 128 == 0, "lane_tile must be a multiple of 128"
        T = int(lane_tile)
    else:
        T = _pick_lane_tile(hw128, C, itemsize, vmem_budget)
    HW_pad = -(-HW // T) * T                    # every tile full: no masked stores
    pad = HW_pad - HW

    fy_flat = fy.reshape(B, C, HW)
    x_flat = x.reshape(B, 3, HW)
    if pad:
        fy_flat = jnp.pad(fy_flat, ((0, 0), (0, 0), (0, pad)))
        x_flat = jnp.pad(x_flat, ((0, 0), (0, 0), (0, pad)))

    fuse = (C % 8 == 0)                         # sublane-aligned slice of fused result
    if fuse:
        kernel = functools.partial(_sam_kernel_fused, C=C)
        weight_args = (
            jnp.concatenate([w1, w2], axis=0).astype(cdt),                     # (C+3, C)
            jnp.concatenate([b1, b2], axis=0).reshape(C + 3, 1).astype(f32),   # (C+3, 1)
            w3.astype(f32),                      # conv3 consumes f32 img -> keep f32
            b3.reshape(C, 1).astype(f32),
        )
        weight_specs = [
            pl.BlockSpec((C + 3, C), lambda b, t: (0, 0)),
            pl.BlockSpec((C + 3, 1), lambda b, t: (0, 0)),
            pl.BlockSpec((C, 3), lambda b, t: (0, 0)),
            pl.BlockSpec((C, 1), lambda b, t: (0, 0)),
        ]
    else:
        kernel = _sam_kernel
        weight_args = (
            w1.astype(cdt), b1.reshape(C, 1).astype(f32),
            w2.astype(cdt), b2.reshape(3, 1).astype(f32),
            w3.astype(f32), b3.reshape(C, 1).astype(f32),
        )
        weight_specs = [
            pl.BlockSpec((C, C), lambda b, t: (0, 0)),
            pl.BlockSpec((C, 1), lambda b, t: (0, 0)),
            pl.BlockSpec((3, C), lambda b, t: (0, 0)),
            pl.BlockSpec((3, 1), lambda b, t: (0, 0)),
            pl.BlockSpec((C, 3), lambda b, t: (0, 0)),
            pl.BlockSpec((C, 1), lambda b, t: (0, 0)),
        ]

    y_flat, img_flat = pl.pallas_call(
        kernel,
        out_shape=(jax.ShapeDtypeStruct((B, C, HW_pad), fy.dtype),
                   jax.ShapeDtypeStruct((B, 3, HW_pad), x.dtype)),
        grid_spec=pltpu.PrefetchScalarGridSpec(
            num_scalar_prefetch=0,
            grid=(B, HW_pad // T),
            in_specs=[
                # NOTE: if xprof shows exposed DMA on the streaming inputs,
                # add pipeline_mode=pl.Buffered(3) to these two specs.
                pl.BlockSpec((1, C, T), lambda b, t: (b, 0, t)),   # fy tile
                pl.BlockSpec((1, 3, T), lambda b, t: (b, 0, t)),   # x tile
                *weight_specs,                                     # resident weights
            ],
            out_specs=[
                pl.BlockSpec((1, C, T), lambda b, t: (b, 0, t)),   # y
                pl.BlockSpec((1, 3, T), lambda b, t: (b, 0, t)),   # img
            ],
        ),
        compiler_params=pltpu.CompilerParams(
            dimension_semantics=("parallel", "parallel"),
            vmem_limit_bytes=vmem_budget,
        ),
    )(fy_flat, x_flat, *weight_args)

    if pad:
        y_flat = y_flat[..., :HW]
        img_flat = img_flat[..., :HW]
    return y_flat.reshape(B, C, H, W), img_flat.reshape(B, 3, H, W)


# --------------------------------------------------------------------------- #
# Reference + test
# --------------------------------------------------------------------------- #
def _reference(fy, x, w1, b1, w2, b2, w3, b3):
    def conv1x1(z, w, b):
        return jnp.einsum('oc,bchw->bohw', w, z) + b[None, :, None, None]
    y1 = conv1x1(fy, w1, b1)
    img = conv1x1(fy, w2, b2) + x
    y2 = jax.nn.sigmoid(conv1x1(img, w3, b3))
    return y1 * y2 + fy, img


def _run_case(key, B, C, H, W):
    kfy, kx, k1, k2, k3, kb1, kb2, kb3 = jax.random.split(key, 8)
    fy = jax.random.normal(kfy, (B, C, H, W), jnp.float32)
    x = jax.random.normal(kx, (B, 3, H, W), jnp.float32)

    # PyTorch Conv2d default init: uniform in [-1/sqrt(fan_in), 1/sqrt(fan_in)],
    # fan_in = in_channels * k * k (k = 1 here).
    def uinit(k, shape, fan_in):
        bound = 1.0 / (fan_in ** 0.5)
        return jax.random.uniform(k, shape, jnp.float32, -bound, bound)

    w1 = uinit(k1, (C, C), C)
    b1 = uinit(kb1, (C,), C)
    w2 = uinit(k2, (3, C), C)
    b2 = uinit(kb2, (3,), C)
    w3 = uinit(k3, (C, 3), 3)
    b3 = uinit(kb3, (C,), 3)

    y, img = supervised_attention_module(fy, x, w1, b1, w2, b2, w3, b3)
    jax.block_until_ready((y, img))

    y_ref, img_ref = _reference(fy, x, w1, b1, w2, b2, w3, b3)
    assert y.shape == (B, C, H, W) and img.shape == (B, 3, H, W)
    assert jnp.allclose(img, img_ref, atol=1e-5, rtol=1e-5), \
        f"img mismatch vs reference (B={B}, C={C}, H={H}, W={W})"
    assert jnp.allclose(y, y_ref, atol=1e-5, rtol=1e-5), \
        f"y mismatch vs reference (B={B}, C={C}, H={H}, W={W})"


if __name__ == "__main__":
    key = jax.random.PRNGKey(0)
    ka, kb = jax.random.split(key)
    # Unfused path (C not a multiple of 8); H*W is an exact tile multiple.
    _run_case(ka, B=2, C=4, H=16, W=16)
    # Fused conv1/conv2 path (C % 8 == 0) + odd spatial size -> lane padding.
    _run_case(kb, B=1, C=8, H=9, W=9)
    print("KERNEL_OK")
</pallas_src>

<mosaic_0001>
module attributes {stable_mosaic.version = 11 : i64} {
  func.func @_sam_kernel(%arg0: i32, %arg1: i32, %arg2: memref<1x4x256xf32, #tpu.memory_space<vmem>>, %arg3: memref<1x3x256xf32, #tpu.memory_space<vmem>>, %arg4: memref<4x4xf32, #tpu.memory_space<vmem>>, %arg5: memref<4x1xf32, #tpu.memory_space<vmem>>, %arg6: memref<3x4xf32, #tpu.memory_space<vmem>>, %arg7: memref<3x1xf32, #tpu.memory_space<vmem>>, %arg8: memref<4x3xf32, #tpu.memory_space<vmem>>, %arg9: memref<4x1xf32, #tpu.memory_space<vmem>>, %arg10: memref<1x4x256xf32, #tpu.memory_space<vmem>>, %arg11: memref<1x3x256xf32, #tpu.memory_space<vmem>>) attributes {dimension_semantics = [#tpu.dimension_semantics<parallel>, #tpu.dimension_semantics<parallel>], iteration_bounds = array<i64: 2, 1>, scalar_prefetch = 0 : i64, scratch_operands = 0 : i64, tpu.core_type = #tpu.core_type<tc>, window_params = [{transform_indices = @transform_0, window_bounds = array<i64: 1, 4, 256>}, {transform_indices = @transform_1, window_bounds = array<i64: 1, 3, 256>}, {pipeline_mode = #tpu.pipeline_mode<synchronous>, transform_indices = @transform_2, window_bounds = array<i64: 4, 4>}, {pipeline_mode = #tpu.pipeline_mode<synchronous>, transform_indices = @transform_3, window_bounds = array<i64: 4, 1>}, {pipeline_mode = #tpu.pipeline_mode<synchronous>, transform_indices = @transform_4, window_bounds = array<i64: 3, 4>}, {pipeline_mode = #tpu.pipeline_mode<synchronous>, transform_indices = @transform_5, window_bounds = array<i64: 3, 1>}, {pipeline_mode = #tpu.pipeline_mode<synchronous>, transform_indices = @transform_6, window_bounds = array<i64: 4, 3>}, {pipeline_mode = #tpu.pipeline_mode<synchronous>, transform_indices = @transform_7, window_bounds = array<i64: 4, 1>}, {transform_indices = @transform_8, window_bounds = array<i64: 1, 4, 256>}, {transform_indices = @transform_9, window_bounds = array<i64: 1, 3, 256>}]} {
    %c0 = arith.constant 0 : index
    %c0_0 = arith.constant 0 : index
    %c0_1 = arith.constant 0 : index
    %0 = vector.load %arg2[%c0, %c0_0, %c0_1] : memref<1x4x256xf32, #tpu.memory_space<vmem>>, vector<1x4x256xf32>
    %1 = vector.shape_cast %0 : vector<1x4x256xf32> to vector<4x256xf32>
    %c0_2 = arith.constant 0 : index
    %c0_3 = arith.constant 0 : index
    %c0_4 = arith.constant 0 : index
    %2 = vector.load %arg3[%c0_2, %c0_3, %c0_4] : memref<1x3x256xf32, #tpu.memory_space<vmem>>, vector<1x3x256xf32>
    %3 = vector.shape_cast %2 : vector<1x3x256xf32> to vector<3x256xf32>
    %c0_5 = arith.constant 0 : index
    %c0_6 = arith.constant 0 : index
    %4 = vector.load %arg4[%c0_5, %c0_6] : memref<4x4xf32, #tpu.memory_space<vmem>>, vector<4x4xf32>
    %cst = arith.constant dense<0.000000e+00> : vector<4x256xf32>
    %5 = tpu.matmul %4, %1, %cst {dimension_numbers = #tpu.dot_dimension_numbers<[1], [0], [0], [1], [0, 0, 1, 1], [], []>} : vector<4x4xf32>, vector<4x256xf32>, vector<4x256xf32> -> vector<4x256xf32>
    %c0_7 = arith.constant 0 : index
    %c0_8 = arith.constant 0 : index
    %6 = vector.load %arg5[%c0_7, %c0_8] : memref<4x1xf32, #tpu.memory_space<vmem>>, vector<4x1xf32>
    %7 = vector.broadcast %6 : vector<4x1xf32> to vector<4x256xf32>
    %8 = arith.addf %5, %7 : vector<4x256xf32>
    %c0_9 = arith.constant 0 : index
    %c0_10 = arith.constant 0 : index
    %9 = vector.load %arg6[%c0_9, %c0_10] : memref<3x4xf32, #tpu.memory_space<vmem>>, vector<3x4xf32>
    %cst_11 = arith.constant dense<0.000000e+00> : vector<3x256xf32>
    %10 = tpu.matmul %9, %1, %cst_11 {dimension_numbers = #tpu.dot_dimension_numbers<[1], [0], [0], [1], [0, 0, 1, 1], [], []>} : vector<3x4xf32>, vector<4x256xf32>, vector<3x256xf32> -> vector<3x256xf32>
    %c0_12 = arith.constant 0 : index
    %c0_13 = arith.constant 0 : index
    %11 = vector.load %arg7[%c0_12, %c0_13] : memref<3x1xf32, #tpu.memory_space<vmem>>, vector<3x1xf32>
    %12 = vector.broadcast %11 : vector<3x1xf32> to vector<3x256xf32>
    %13 = arith.addf %10, %12 : vector<3x256xf32>
    %14 = arith.addf %13, %3 : vector<3x256xf32>
    %c0_14 = arith.constant 0 : index
    %c0_15 = arith.constant 0 : index
    %15 = vector.load %arg8[%c0_14, %c0_15] : memref<4x3xf32, #tpu.memory_space<vmem>>, vector<4x3xf32>
    %cst_16 = arith.constant dense<0.000000e+00> : vector<4x256xf32>
    %16 = tpu.matmul %15, %14, %cst_16 {dimension_numbers = #tpu.dot_dimension_numbers<[1], [0], [0], [1], [0, 0, 1, 1], [], []>} : vector<4x3xf32>, vector<3x256xf32>, vector<4x256xf32> -> vector<4x256xf32>
    %c0_17 = arith.constant 0 : index
    %c0_18 = arith.constant 0 : index
    %17 = vector.load %arg9[%c0_17, %c0_18] : memref<4x1xf32, #tpu.memory_space<vmem>>, vector<4x1xf32>
    %18 = vector.broadcast %17 : vector<4x1xf32> to vector<4x256xf32>
    %19 = arith.addf %16, %18 : vector<4x256xf32>
    %20 = arith.negf %19 : vector<4x256xf32>
    %21 = math.exp %20 : vector<4x256xf32>
    %cst_19 = arith.constant 1.000000e+00 : f32
    %22 = vector.broadcast %cst_19 : f32 to vector<4x256xf32>
    %23 = arith.addf %22, %21 : vector<4x256xf32>
    %24 = arith.divf %22, %23 : vector<4x256xf32>
    %25 = arith.mulf %8, %24 : vector<4x256xf32>
    %26 = arith.addf %25, %1 : vector<4x256xf32>
    %c0_20 = arith.constant 0 : index
    %c0_21 = arith.constant 0 : index
    %c0_22 = arith.constant 0 : index
    %27 = vector.load %arg10[%c0_20, %c0_21, %c0_22] : memref<1x4x256xf32, #tpu.memory_space<vmem>>, vector<1x4x256xf32>
    %28 = vector.shape_cast %27 : vector<1x4x256xf32> to vector<4x256xf32>
    %29 = vector.shape_cast %26 : vector<4x256xf32> to vector<1x4x256xf32>
    tpu.vector_store %arg10[%c0_20, %c0_21, %c0_22], %29 {strides = array<i32>} : memref<1x4x256xf32, #tpu.memory_space<vmem>>, vector<1x4x256xf32>,
    %c0_23 = arith.constant 0 : index
    %c0_24 = arith.constant 0 : index
    %c0_25 = arith.constant 0 : index
    %30 = vector.load %arg11[%c0_23, %c0_24, %c0_25] : memref<1x3x256xf32, #tpu.memory_space<vmem>>, vector<1x3x256xf32>
    %31 = vector.shape_cast %30 : vector<1x3x256xf32> to vector<3x256xf32>
    %32 = vector.shape_cast %14 : vector<3x256xf32> to vector<1x3x256xf32>
    tpu.vector_store %arg11[%c0_23, %c0_24, %c0_25], %32 {strides = array<i32>} : memref<1x3x256xf32, #tpu.memory_space<vmem>>, vector<1x3x256xf32>,
    return
  }
  func.func @transform_0(%arg0: i32, %arg1: i32) -> (i32, i32, i32) {
    %c0_i32 = arith.constant 0 : i32
    %c0_i32_0 = arith.constant 0 : i32
    return %arg0, %c0_i32, %arg1 : i32, i32, i32
  }
  func.func @transform_1(%arg0: i32, %arg1: i32) -> (i32, i32, i32) {
    %c0_i32 = arith.constant 0 : i32
    %c0_i32_0 = arith.constant 0 : i32
    return %arg0, %c0_i32, %arg1 : i32, i32, i32
  }
  func.func @transform_2(%arg0: i32, %arg1: i32) -> (i32, i32) {
    %c0_i32 = arith.constant 0 : i32
    %c0_i32_0 = arith.constant 0 : i32
    %c0_i32_1 = arith.constant 0 : i32
    return %c0_i32, %c0_i32_0 : i32, i32
  }
  func.func @transform_3(%arg0: i32, %arg1: i32) -> (i32, i32) {
    %c0_i32 = arith.constant 0 : i32
    %c0_i32_0 = arith.constant 0 : i32
    %c0_i32_1 = arith.constant 0 : i32
    return %c0_i32, %c0_i32_0 : i32, i32
  }
  func.func @transform_4(%arg0: i32, %arg1: i32) -> (i32, i32) {
    %c0_i32 = arith.constant 0 : i32
    %c0_i32_0 = arith.constant 0 : i32
    %c0_i32_1 = arith.constant 0 : i32
    return %c0_i32, %c0_i32_0 : i32, i32
  }
  func.func @transform_5(%arg0: i32, %arg1: i32) -> (i32, i32) {
    %c0_i32 = arith.constant 0 : i32
    %c0_i32_0 = arith.constant 0 : i32
    %c0_i32_1 = arith.constant 0 : i32
    return %c0_i32, %c0_i32_0 : i32, i32
  }
  func.func @transform_6(%arg0: i32, %arg1: i32) -> (i32, i32) {
    %c0_i32 = arith.constant 0 : i32
    %c0_i32_0 = arith.constant 0 : i32
    %c0_i32_1 = arith.constant 0 : i32
    return %c0_i32, %c0_i32_0 : i32, i32
  }
  func.func @transform_7(%arg0: i32, %arg1: i32) -> (i32, i32) {
    %c0_i32 = arith.constant 0 : i32
    %c0_i32_0 = arith.constant 0 : i32
    %c0_i32_1 = arith.constant 0 : i32
    return %c0_i32, %c0_i32_0 : i32, i32
  }
  func.func @transform_8(%arg0: i32, %arg1: i32) -> (i32, i32, i32) {
    %c0_i32 = arith.constant 0 : i32
    %c0_i32_0 = arith.constant 0 : i32
    return %arg0, %c0_i32, %arg1 : i32, i32, i32
  }
  func.func @transform_9(%arg0: i32, %arg1: i32) -> (i32, i32, i32) {
    %c0_i32 = arith.constant 0 : i32
    %c0_i32_0 = arith.constant 0 : i32
    return %arg0, %c0_i32, %arg1 : i32, i32, i32
  }
}

</mosaic_0001>

<llo_original>
// kernel: tpu_custom_call.1
$region0: #{tpu_custom_call.1}
  #allocation0 [shape = 'u32[]', space=smem, size = 0x4, offset = 0x4, fixed_abs, tag = 'smem constant byte address 0x4 - core index']
  #allocation1 [shape = 'u32[144,128]{1,0:T(1,128)}', space=vmem, size = 0x12000, scoped, tag = 'internal scratch']
  %s0 = inlined_call_operand.vmem [shape: f32[2,4,256], index: 0, kind: input, shape index: {}]
  %s1 = inlined_call_operand.vmem [shape: f32[2,3,256], index: 1, kind: input, shape index: {}]
  %s2 = inlined_call_operand.vmem [shape: f32[4,4], index: 2, kind: input, shape index: {}]
  %s3 = inlined_call_operand.vmem [shape: f32[4,1], index: 3, kind: input, shape index: {}]
  %s4 = inlined_call_operand.vmem [shape: f32[3,4], index: 4, kind: input, shape index: {}]
  %s5 = inlined_call_operand.vmem [shape: f32[3,1], index: 5, kind: input, shape index: {}]
  %s6 = inlined_call_operand.vmem [shape: f32[4,3], index: 6, kind: input, shape index: {}]
  %s7 = inlined_call_operand.vmem [shape: f32[4,1], index: 7, kind: input, shape index: {}]
  %s8 = inlined_call_operand.hbm [shape: f32[2,4,256], index: 8, kind: output, shape index: {0}]
  %s9 = inlined_call_operand.vmem [shape: f32[2,3,256], index: 9, kind: output, shape index: {1}]
  %10 = xla_tuple %s8, %s9
  %s11 = sld [smem:[#allocation0]]
  $region73: #{tpu_custom_call.1} parent=0
    _
  %s13 = ssub.s32 1, %s11
  %s14 = scalar_select 0, %s13, %s11
  $region1: #{tpu_custom_call.1} parent=0
    #allocation2 [shape = 'u8[8192]{0}', space=vmem, size = 0x2000, scoped, tag = 'output window, operand 0']
    #allocation3 [shape = 's32[2]{0}', space=sflag, size = 0x8, scoped, tag = 'scoped memory for tpu_custom_call.1']
    %15 = vsyncpa [#allocation3], 0
    %s16 = scalar_lea.sflag [#allocation3], 1
    %17 = vsyncpa %s16, 0
    loop: start=0, step=1, limit=4
    $region2: #{tpu_custom_call.1} parent=1 // loop_pre_header
      _
    $region3: #{tpu_custom_call.1} parent=1 // loop_header
      %s19 = sphi 0, %s23
      %p20 = scmp.ge.s32.totalorder %s19, 4
      %s26 = sphi 0, %s38
      %s27 = sphi 0, %s34
      %s28 = sphi 0, %s26
      %s29 = sphi 0, %s27
      %s30 = sphi 0, %s28
      %s31 = sphi 0, %s29
      %s43 = sphi 0, %s45
      %s46 = sphi 0, %s43
      %s47 = sphi 0, %s46
      %s63 = sphi 0, %s47
      %s71 = sphi 0, %s73
      %s74 = sphi 0, %s71
      %s75 = sphi 0, %s74
      %s91 = sphi 0, %s75
      %s95 = sphi 0, %s95
      %s97 = sphi 0, %s95
      %s98 = sphi 0, %s97
      %s112 = sphi 0, %s98
      %s116 = sphi 0, %s116
      %s118 = sphi 0, %s116
      %s119 = sphi 0, %s118
      %s133 = sphi 0, %s119
      %s137 = sphi 0, %s137
      %s139 = sphi 0, %s137
      %s140 = sphi 0, %s139
      %s154 = sphi 0, %s140
      %s158 = sphi 0, %s158
      %s160 = sphi 0, %s158
      %s161 = sphi 0, %s160
      %s175 = sphi 0, %s161
      %s179 = sphi 0, %s179
      %s181 = sphi 0, %s179
      %s182 = sphi 0, %s181
      %s196 = sphi 0, %s182
      %s200 = sphi 0, %s200
      %s202 = sphi 0, %s200
      %s203 = sphi 0, %s202
      %s217 = sphi 0, %s203
      %s225 = sphi 0, %s227
      %s228 = sphi 0, %s225
      %s229 = sphi 0, %s228
      %s245 = sphi 0, %s229
      %s253 = sphi 0, %s255
      %s256 = sphi 0, %s253
      %s257 = sphi 0, %s256
      %s273 = sphi 0, %s257
    $region4: #{tpu_custom_call.1} parent=1 // loop_header_branch
      %22 = sbr.rel (%p20) target = $region8
    $region5: #{tpu_custom_call.1} parent=1 // loop_body
      %s24 = ssub.s32 %s19, 1
      %s25 = ssub.s32 %s19, 2
      %s32 = sadd.s32 1, %s27
      %p33 = scmp.ge.s32.totalorder %s32, 1
      %s34 = scalar_select %p33, 0, %s32
      %s35 = sadd.s32 1, %s26
      %s36 = scalar_select %p33, %s35, %s26
      %p37 = scmp.ge.s32.totalorder %s36, 2
      %s38 = scalar_select %p37, 0, %s36
      %s39 = ssub.s32 %s26, %s38
      %s40 = ssub.s32 %s27, %s34
      %s41 = sor.u32 %s39, %s40
      %p42 = scmp.eq.s32.totalorder %s41, 0
      %s44 = sadd.s32 %s43, 1
      %s45 = scalar_select %p42, %s43, %s44
      %p48 = pneg %p42
      %p49 = scmp.eq.s32.totalorder %s19, 1
      %p50 = por %p48, %p49
      %p51 = scmp.ne.s32.totalorder %s43, %s46
      %p52 = scmp.eq.s32.totalorder %s19, 0
      %p53 = por %p51, %p52
      %p54 = scmp.ne.s32.totalorder %s43, %s46
      %p55 = scmp.eq.s32.totalorder %s24, 1
      %p56 = por %p54, %p55
      %p57 = scmp.ne.s32.totalorder %s46, %s47
      %p58 = scmp.eq.s32.totalorder %s24, 0
      %p59 = por %p57, %p58
      %p60 = scmp.ne.s32.totalorder %s46, %s47
      %p61 = scmp.eq.s32.totalorder %s25, 1
      %p62 = por %p60, %p61
      %p64 = scmp.ne.s32.totalorder %s47, %s63
      %p65 = scmp.eq.s32.totalorder %s25, 0
      %p66 = por %p64, %p65
      %s67 = ssub.s32 %s26, %s38
      %s68 = ssub.s32 %s27, %s34
      %s69 = sor.u32 %s67, %s68
      %p70 = scmp.eq.s32.totalorder %s69, 0
      %s72 = sadd.s32 %s71, 1
      %s73 = scalar_select %p70, %s71, %s72
      %p76 = pneg %p70
      %p77 = scmp.eq.s32.totalorder %s19, 1
      %p78 = por %p76, %p77
      %p79 = scmp.ne.s32.totalorder %s71, %s74
      %p80 = scmp.eq.s32.totalorder %s19, 0
      %p81 = por %p79, %p80
      %p82 = scmp.ne.s32.totalorder %s71, %s74
      %p83 = scmp.eq.s32.totalorder %s24, 1
      %p84 = por %p82, %p83
      %p85 = scmp.ne.s32.totalorder %s74, %s75
      %p86 = scmp.eq.s32.totalorder %s24, 0
      %p87 = por %p85, %p86
      %p88 = scmp.ne.s32.totalorder %s74, %s75
      %p89 = scmp.eq.s32.totalorder %s25, 1
      %p90 = por %p88, %p89
      %p92 = scmp.ne.s32.totalorder %s75, %s91
      %p93 = scmp.eq.s32.totalorder %s25, 0
      %p94 = por %p92, %p93
      %s96 = sadd.s32 %s95, 1
      %p99 = scmp.eq.s32.totalorder %s19, 1
      %p100 = scmp.ne.s32.totalorder %s95, %s97
      %p101 = scmp.eq.s32.totalorder %s19, 0
      %p102 = por %p100, %p101
      %p103 = scmp.ne.s32.totalorder %s95, %s97
      %p104 = scmp.eq.s32.totalorder %s24, 1
      %p105 = por %p103, %p104
      %p106 = scmp.ne.s32.totalorder %s97, %s98
      %p107 = scmp.eq.s32.totalorder %s24, 0
      %p108 = por %p106, %p107
      %p109 = scmp.ne.s32.totalorder %s97, %s98
      %p110 = scmp.eq.s32.totalorder %s25, 1
      %p111 = por %p109, %p110
      %p113 = scmp.ne.s32.totalorder %s98, %s112
      %p114 = scmp.eq.s32.totalorder %s25, 0
      %p115 = por %p113, %p114
      %s117 = sadd.s32 %s116, 1
      %p120 = scmp.eq.s32.totalorder %s19, 1
      %p121 = scmp.ne.s32.totalorder %s116, %s118
      %p122 = scmp.eq.s32.totalorder %s19, 0
      %p123 = por %p121, %p122
      %p124 = scmp.ne.s32.totalorder %s116, %s118
      %p125 = scmp.eq.s32.totalorder %s24, 1
      %p126 = por %p124, %p125
      %p127 = scmp.ne.s32.totalorder %s118, %s119
      %p128 = scmp.eq.s32.totalorder %s24, 0
      %p129 = por %p127, %p128
      %p130 = scmp.ne.s32.totalorder %s118, %s119
      %p131 = scmp.eq.s32.totalorder %s25, 1
      %p132 = por %p130, %p131
      %p134 = scmp.ne.s32.totalorder %s119, %s133
      %p135 = scmp.eq.s32.totalorder %s25, 0
      %p136 = por %p134, %p135
      %s138 = sadd.s32 %s137, 1
      %p141 = scmp.eq.s32.totalorder %s19, 1
      %p142 = scmp.ne.s32.totalorder %s137, %s139
      %p143 = scmp.eq.s32.totalorder %s19, 0
      %p144 = por %p142, %p143
      %p145 = scmp.ne.s32.totalorder %s137, %s139
      %p146 = scmp.eq.s32.totalorder %s24, 1
      %p147 = por %p145, %p146
      %p148 = scmp.ne.s32.totalorder %s139, %s140
      %p149 = scmp.eq.s32.totalorder %s24, 0
      %p150 = por %p148, %p149
      %p151 = scmp.ne.s32.totalorder %s139, %s140
      %p152 = scmp.eq.s32.totalorder %s25, 1
      %p153 = por %p151, %p152
      %p155 = scmp.ne.s32.totalorder %s140, %s154
      %p156 = scmp.eq.s32.totalorder %s25, 0
      %p157 = por %p155, %p156
      %s159 = sadd.s32 %s158, 1
      %p162 = scmp.eq.s32.totalorder %s19, 1
      %p163 = scmp.ne.s32.totalorder %s158, %s160
      %p164 = scmp.eq.s32.totalorder %s19, 0
      %p165 = por %p163, %p164
      %p166 = scmp.ne.s32.totalorder %s158, %s160
      %p167 = scmp.eq.s32.totalorder %s24, 1
      %p168 = por %p166, %p167
      %p169 = scmp.ne.s32.totalorder %s160, %s161
      %p170 = scmp.eq.s32.totalorder %s24, 0
      %p171 = por %p169, %p170
      %p172 = scmp.ne.s32.totalorder %s160, %s161
      %p173 = scmp.eq.s32.totalorder %s25, 1
      %p174 = por %p172, %p173
      %p176 = scmp.ne.s32.totalorder %s161, %s175
      %p177 = scmp.eq.s32.totalorder %s25, 0
      %p178 = por %p176, %p177
      %s180 = sadd.s32 %s179, 1
      %p183 = scmp.eq.s32.totalorder %s19, 1
      %p184 = scmp.ne.s32.totalorder %s179, %s181
      %p185 = scmp.eq.s32.totalorder %s19, 0
      %p186 = por %p184, %p185
      %p187 = scmp.ne.s32.totalorder %s179, %s181
      %p188 = scmp.eq.s32.totalorder %s24, 1
      %p189 = por %p187, %p188
      %p190 = scmp.ne.s32.totalorder %s181, %s182
      %p191 = scmp.eq.s32.totalorder %s24, 0
      %p192 = por %p190, %p191
      %p193 = scmp.ne.s32.totalorder %s181, %s182
      %p194 = scmp.eq.s32.totalorder %s25, 1
      %p195 = por %p193, %p194
      %p197 = scmp.ne.s32.totalorder %s182, %s196
      %p198 = scmp.eq.s32.totalorder %s25, 0
      %p199 = por %p197, %p198
      %s201 = sadd.s32 %s200, 1
      %p204 = scmp.eq.s32.totalorder %s19, 1
      %p205 = scmp.ne.s32.totalorder %s200, %s202
      %p206 = scmp.eq.s32.totalorder %s19, 0
      %p207 = por %p205, %p206
      %p208 = scmp.ne.s32.totalorder %s200, %s202
      %p209 = scmp.eq.s32.totalorder %s24, 1
      %p210 = por %p208, %p209
      %p211 = scmp.ne.s32.totalorder %s202, %s203
      %p212 = scmp.eq.s32.totalorder %s24, 0
      %p213 = por %p211, %p212
      %p214 = scmp.ne.s32.totalorder %s202, %s203
      %p215 = scmp.eq.s32.totalorder %s25, 1
      %p216 = por %p214, %p215
      %p218 = scmp.ne.s32.totalorder %s203, %s217
      %p219 = scmp.eq.s32.totalorder %s25, 0
      %p220 = por %p218, %p219
      %s221 = ssub.s32 %s26, %s38
      %s222 = ssub.s32 %s27, %s34
      %s223 = sor.u32 %s221, %s222
      %p224 = scmp.eq.s32.totalorder %s223, 0
      %s226 = sadd.s32 %s225, 1
      %s227 = scalar_select %p224, %s225, %s226
      %p230 = pneg %p224
      %p231 = scmp.eq.s32.totalorder %s19, 1
      %p232 = por %p230, %p231
      %p233 = scmp.ne.s32.totalorder %s225, %s228
      %p234 = scmp.eq.s32.totalorder %s19, 0
      %p235 = por %p233, %p234
      %p236 = scmp.ne.s32.totalorder %s225, %s228
      %p237 = scmp.eq.s32.totalorder %s24, 1
      %p238 = por %p236, %p237
      %p239 = scmp.ne.s32.totalorder %s228, %s229
      %p240 = scmp.eq.s32.totalorder %s24, 0
      %p241 = por %p239, %p240
      %p242 = scmp.ne.s32.totalorder %s228, %s229
      %p243 = scmp.eq.s32.totalorder %s25, 1
      %p244 = por %p242, %p243
      %p246 = scmp.ne.s32.totalorder %s229, %s245
      %p247 = scmp.eq.s32.totalorder %s25, 0
      %p248 = por %p246, %p247
      %s249 = ssub.s32 %s26, %s38
      %s250 = ssub.s32 %s27, %s34
      %s251 = sor.u32 %s249, %s250
      %p252 = scmp.eq.s32.totalorder %s251, 0
      %s254 = sadd.s32 %s253, 1
      %s255 = scalar_select %p252, %s253, %s254
      %p258 = pneg %p252
      %p259 = scmp.eq.s32.totalorder %s19, 1
      %p260 = por %p258, %p259
      %p261 = scmp.ne.s32.totalorder %s253, %s256
      %p262 = scmp.eq.s32.totalorder %s19, 0
      %p263 = por %p261, %p262
      %p264 = scmp.ne.s32.totalorder %s253, %s256
      %p265 = scmp.eq.s32.totalorder %s24, 1
      %p266 = por %p264, %p265
      %p267 = scmp.ne.s32.totalorder %s256, %s257
      %p268 = scmp.eq.s32.totalorder %s24, 0
      %p269 = por %p267, %p268
      %p270 = scmp.ne.s32.totalorder %s256, %s257
      %p271 = scmp.eq.s32.totalorder %s25, 1
      %p272 = por %p270, %p271
      %p274 = scmp.ne.s32.totalorder %s257, %s273
      %p275 = scmp.eq.s32.totalorder %s25, 0
      %p276 = por %p274, %p275
      %p277 = scmp.le.s32.totalorder 1, %s19
      %p278 = scmp.lt.s32.totalorder %s19, 3
      %p279 = pnand %p277, %p278
      %p280 = pneg %p279
      // Predicated region
      $region9: #{tpu_custom_call.1} parent=5 // pred_check
        _
      $region10: #{tpu_custom_call.1} parent=5 // pred_check_branch
        %282 = sbr.rel (%p279) target = $region12
      $region11: #{tpu_custom_call.1} parent=5 // pred_region
        %s283 = ssub.s32 %s19, 1
        // Predicated region
        $region13: #{tpu_custom_call.1} parent=11 // pred_check
          %p284 = pneg %p108
        $region14: #{tpu_custom_call.1} parent=11 // pred_check_branch
          %286 = sbr.rel (%p284) target = $region16
        $region15: #{tpu_custom_call.1} parent=11 // pred_region
          _
        $region16: #{tpu_custom_call.1} parent=11 // pred_fallthru
          _
        // Predicated region
        $region17: #{tpu_custom_call.1} parent=11 // pred_check
          %p287 = pneg %p129
        $region18: #{tpu_custom_call.1} parent=11 // pred_check_branch
          %289 = sbr.rel (%p287) target = $region20
        $region19: #{tpu_custom_call.1} parent=11 // pred_region
          _
        $region20: #{tpu_custom_call.1} parent=11 // pred_fallthru
          _
        // Predicated region
        $region21: #{tpu_custom_call.1} parent=11 // pred_check
          %p290 = pneg %p150
        $region22: #{tpu_custom_call.1} parent=11 // pred_check_branch
          %292 = sbr.rel (%p290) target = $region24
        $region23: #{tpu_custom_call.1} parent=11 // pred_region
          _
        $region24: #{tpu_custom_call.1} parent=11 // pred_fallthru
          _
        // Predicated region
        $region25: #{tpu_custom_call.1} parent=11 // pred_check
          %p293 = pneg %p171
        $region26: #{tpu_custom_call.1} parent=11 // pred_check_branch
          %295 = sbr.rel (%p293) target = $region28
        $region27: #{tpu_custom_call.1} parent=11 // pred_region
          _
        $region28: #{tpu_custom_call.1} parent=11 // pred_fallthru
          _
        // Predicated region
        $region29: #{tpu_custom_call.1} parent=11 // pred_check
          %p296 = pneg %p192
        $region30: #{tpu_custom_call.1} parent=11 // pred_check_branch
          %298 = sbr.rel (%p296) target = $region32
        $region31: #{tpu_custom_call.1} parent=11 // pred_region
          _
        $region32: #{tpu_custom_call.1} parent=11 // pred_fallthru
          _
        // Predicated region
        $region33: #{tpu_custom_call.1} parent=11 // pred_check
          %p299 = pneg %p213
        $region34: #{tpu_custom_call.1} parent=11 // pred_check_branch
          %301 = sbr.rel (%p299) target = $region36
        $region35: #{tpu_custom_call.1} parent=11 // pred_region
          _
        $region36: #{tpu_custom_call.1} parent=11 // pred_fallthru
          _
      $region12: #{tpu_custom_call.1} parent=5 // pred_fallthru
        _
      %p302 = scmp.lt.s32.totalorder %s19, 2
      // Predicated region
      $region37: #{tpu_custom_call.1} parent=5 // pred_check
        %p303 = pneg %p302
      $region38: #{tpu_custom_call.1} parent=5 // pred_check_branch
        %305 = sbr.rel (%p303) target = $region40
      $region39: #{tpu_custom_call.1} parent=5 // pred_region
        // Predicated region
        $region41: #{tpu_custom_call.1} parent=39 // pred_check
          %p306 = pneg %p53
        $region42: #{tpu_custom_call.1} parent=39 // pred_check_branch
          %308 = sbr.rel (%p306) target = $region44
        $region43: #{tpu_custom_call.1} parent=39 // pred_region
          %s309 = smul.u32 2, %s27
          %p310 = scmp.lt.s32.totalorder %s26, 1
          %s311 = scalar_select %p310, %s26, 1
          %p312 = scmp.lt.s32.totalorder %s309, 1
          %s313 = scalar_select %p312, %s309, 1
          %s314 = smul.addr %s311, 2
          %s315 = sadd.s32 %s313, %s314
          %s316 = smul.addr %s315, 4
          %s317 = scalar_lea.vmem %s0, %s316
          %s318 = smul.u32 2, %s27
        $region44: #{tpu_custom_call.1} parent=39 // pred_fallthru
          _
        // Predicated region
        $region45: #{tpu_custom_call.1} parent=39 // pred_check
          %p319 = pneg %p81
        $region46: #{tpu_custom_call.1} parent=39 // pred_check_branch
          %321 = sbr.rel (%p319) target = $region48
        $region47: #{tpu_custom_call.1} parent=39 // pred_region
          %s322 = smul.u32 2, %s27
          %p323 = scmp.lt.s32.totalorder %s26, 1
          %s324 = scalar_select %p323, %s26, 1
          %p325 = scmp.lt.s32.totalorder %s322, 1
          %s326 = scalar_select %p325, %s322, 1
          %s327 = smul.addr %s324, 2
          %s328 = sadd.s32 %s326, %s327
          %s329 = smul.addr %s328, 4
          %s330 = scalar_lea.vmem %s1, %s329
          %s331 = smul.u32 2, %s27
        $region48: #{tpu_custom_call.1} parent=39 // pred_fallthru
          _
      $region40: #{tpu_custom_call.1} parent=5 // pred_fallthru
        _
      %p332 = scmp.le.s32.totalorder 1, %s19
      %p333 = scmp.lt.s32.totalorder %s19, 3
      %p334 = pnand %p332, %p333
      %p335 = pneg %p334
      // Predicated region
      $region49: #{tpu_custom_call.1} parent=5 // pred_check
        _
      $region50: #{tpu_custom_call.1} parent=5 // pred_check_branch
        %337 = sbr.rel (%p334) target = $region52
      $region51: #{tpu_custom_call.1} parent=5 // pred_region
        %s338 = ssub.s32 %s19, 1
        %s339 = smul.u32 2, %s29
        %p340 = scmp.lt.s32.totalorder %s28, 1
        %s341 = scalar_select %p340, %s28, 1
        %p342 = scmp.lt.s32.totalorder %s339, 1
        %s343 = scalar_select %p342, %s339, 1
        %s344 = smul.addr %s341, 2
        %s345 = sadd.s32 %s343, %s344
        %s346 = smul.addr %s345, 4
        %s347 = scalar_lea.vmem %s0, %s346
        %p348 = pneg %p59
        %p349 = pneg %p56
        %s350 = smul.u32 2, %s29
        %p351 = scmp.lt.s32.totalorder %s28, 1
        %s352 = scalar_select %p351, %s28, 1
        %p353 = scmp.lt.s32.totalorder %s350, 1
        %s354 = scalar_select %p353, %s350, 1
        %s355 = smul.addr %s352, 2
        %s356 = sadd.s32 %s354, %s355
        %s357 = smul.addr %s356, 4
        %s358 = scalar_lea.vmem %s1, %s357
        %p359 = pneg %p87
        %p360 = pneg %p84
        %p361 = pneg %p108
        %p362 = pneg %p105
        %p363 = pneg %p129
        %p364 = pneg %p126
        %p365 = pneg %p150
        %p366 = pneg %p147
        %p367 = pneg %p171
        %p368 = pneg %p168
        %p369 = pneg %p192
        %p370 = pneg %p189
        %p371 = pneg %p213
        %p372 = pneg %p210
        %p373 = pneg %p241
        %p374 = pneg %p238
        %s375 = sand.u32 %s228, 1
        %s376 = scalar_lea.sflag [#allocation3], %s375
        %s377 = sand.u32 %s228, 1
        %s378 = smul.addr %s377, 8
        %s379 = scalar_lea.vmem [#allocation2], %s378
        %p380 = pneg %p269
        %p381 = pneg %p266
        %s382 = smul.u32 2, %s29
        %p383 = scmp.lt.s32.totalorder %s28, 1
        %s384 = scalar_select %p383, %s28, 1
        %p385 = scmp.lt.s32.totalorder %s382, 1
        %s386 = scalar_select %p385, %s382, 1
        %s387 = smul.addr %s384, 2
        %s388 = sadd.s32 %s386, %s387
        %s389 = smul.addr %s388, 4
        %s390 = scalar_lea.vmem %s9, %s389
        %s391 = smul.u32 2, %s29
        %p392 = scmp.lt.s32.totalorder %s28, 1
        %s393 = scalar_select %p392, %s28, 1
        %p394 = scmp.lt.s32.totalorder %s391, 1
        %s395 = scalar_select %p394, %s391, 1
        %s396 = smul.addr %s393, 2
        %s397 = sadd.s32 %s395, %s396
        %s398 = smul.addr %s397, 4
        %s399 = scalar_lea.vmem %s0, %s398
        %s400 = smul.u32 2, %s29
        %s401 = smul.u32 2, %s29
        %p402 = scmp.lt.s32.totalorder %s28, 1
        %s403 = scalar_select %p402, %s28, 1
        %p404 = scmp.lt.s32.totalorder %s401, 1
        %s405 = scalar_select %p404, %s401, 1
        %s406 = smul.addr %s403, 2
        %s407 = sadd.s32 %s405, %s406
        %s408 = smul.addr %s407, 4
        %s409 = scalar_lea.vmem %s1, %s408
        %s410 = smul.u32 2, %s29
        %s411 = smul.u32 2, %s29
        %s412 = smul.u32 2, %s29
        %p413 = scmp.lt.s32.totalorder %s28, 1
        %s414 = scalar_select %p413, %s28, 1
        %p415 = scmp.lt.s32.totalorder %s412, 1
        %s416 = scalar_select %p415, %s412, 1
        %s417 = smul.addr %s414, 2
        %s418 = sadd.s32 %s416, %s417
        %s419 = smul.addr %s418, 4
        %s420 = scalar_lea.vmem %s9, %s419
        %s421 = smul.u32 2, %s29
        %v422 = vld [vmem:[%s399] sm:$0xff]
        %v423 = vld [vmem:[%s409] sm:$0x77]
        %v424 = vld [vmem:[%s2] sm:$0xf]
        %v425 = vld [vmem:[%s3] sm:$0xf]
        %427 = vset.pattern.permute.xlu0 0
        %428 = vperm.xlu0 %427, %v425
        %v429 = vpop.permute.xlu0 %428
        %v432 = vcombine.high %v422, %v422
        %vm433 = vcmask 31744
        %v435 = vsel %vm433, %v424, 0
        %vm437 = vcmask 1043456
        %v438 = vsel %vm437, %v422, 0
        %v440 = vsel %vm437, %v432, 0
        %442 = vmatprep.subr.mxu0 %v440
        %443 = vmatpush1.msra.mxu0 %v438
        %444 = vmatprep.subr.mxu0 0.0
        %445 = vmatpush1.msra.mxu0 0.0
        %446 = vmatprep.subr.mxu0 0.0
        %447 = vmatpush1.msra.mxu0 0.0
        %448 = vmatprep.subr.mxu0 0.0
        %449 = vmatpush1.msra.mxu0 0.0
        %450 = vmatprep.subr.mxu0 0.0
        %451 = vmatpush1.msra.mxu0 0.0
        %452 = vmatprep.subr.mxu0 0.0
        %453 = vmatpush1.msra.mxu0 0.0
        %454 = vmatprep.subr.mxu0 0.0
        %455 = vmatpush1.msra.mxu0 0.0
        %456 = vmatprep.subr.mxu0 0.0
        %457 = vmatpush1.msra.mxu0 0.0
        %458 = vmatprep.subr.mxu0 0.0
        %459 = vmatpush1.msra.mxu0 0.0
        %460 = vmatprep.subr.mxu0 0.0
        %461 = vmatpush1.msra.mxu0 0.0
        %462 = vmatprep.subr.mxu0 0.0
        %463 = vmatpush1.msra.mxu0 0.0
        %464 = vmatprep.subr.mxu0 0.0
        %465 = vmatpush1.msra.mxu0 0.0
        %466 = vmatprep.subr.mxu0 0.0
        %467 = vmatpush1.msra.mxu0 0.0
        %468 = vmatprep.subr.mxu0 0.0
        %469 = vmatpush1.msra.mxu0 0.0
        %470 = vmatprep.subr.mxu0 0.0
        %471 = vmatpush1.msra.mxu0 0.0
        %472 = vmatprep.subr.mxu0 0.0
        %473 = vmatpush1.msra.mxu0 0.0
        %474 = vmatprep.subr.mxu0 0.0
        %475 = vmatpush1.msra.mxu0 0.0
        %476 = vmatprep.subr.mxu0 0.0
        %477 = vmatpush1.msra.mxu0 0.0
        %478 = vmatprep.subr.mxu0 0.0
        %479 = vmatpush1.msra.mxu0 0.0
        %480 = vmatprep.subr.mxu0 0.0
        %481 = vmatpush1.msra.mxu0 0.0
        %482 = vmatprep.subr.mxu0 0.0
        %483 = vmatpush1.msra.mxu0 0.0
        %484 = vmatprep.subr.mxu0 0.0
        %485 = vmatpush1.msra.mxu0 0.0
        %486 = vmatprep.subr.mxu0 0.0
        %487 = vmatpush1.msra.mxu0 0.0
        %488 = vmatprep.subr.mxu0 0.0
        %489 = vmatpush1.msra.mxu0 0.0
        %490 = vmatprep.subr.mxu0 0.0
        %491 = vmatpush1.msra.mxu0 0.0
        %492 = vmatprep.subr.mxu0 0.0
        %493 = vmatpush1.msra.mxu0 0.0
        %494 = vmatprep.subr.mxu0 0.0
        %495 = vmatpush1.msra.mxu0 0.0
        %496 = vmatprep.subr.mxu0 0.0
        %497 = vmatpush1.msra.mxu0 0.0
        %498 = vmatprep.subr.mxu0 0.0
        %499 = vmatpush1.msra.mxu0 0.0
        %500 = vmatprep.subr.mxu0 0.0
        %501 = vmatpush1.msra.mxu0 0.0
        %502 = vmatprep.subr.mxu0 0.0
        %503 = vmatpush1.msra.mxu0 0.0
        %504 = vmatprep.subr.mxu0 0.0
        %505 = vmatpush1.msra.mxu0 0.0
        %506 = vmatprep.mubr.f32.mxu0 0.0
        %507 = vmatmul.mubr.f32.gmra.mrb[0].mxu0 %v435
        %v508 = vpop.f32.mrb[0].mxu0
        %v509 = vadd.f32 %v429, %v508
        %v510 = vpop.f32.mrb[0].mxu0
        %v511 = vadd.f32 %v429, %v510
        %512 = vdwg.mxu0
        %v513 = vld [vmem:[%s4] sm:$0x7]
        %v514 = vld [vmem:[%s5] sm:$0x7]
        %516 = vset.pattern.permute.xlu0 0
        %517 = vperm.xlu0 %516, %v514
        %v518 = vpop.permute.xlu0 %517
        %v521 = vsel %vm433, %v513, 0
        %523 = vmatprep.subr.mxu0 %v440
        %524 = vmatpush1.msra.mxu0 %v438
        %525 = vmatprep.subr.mxu0 0.0
        %526 = vmatpush1.msra.mxu0 0.0
        %527 = vmatprep.subr.mxu0 0.0
        %528 = vmatpush1.msra.mxu0 0.0
        %529 = vmatprep.subr.mxu0 0.0
        %530 = vmatpush1.msra.mxu0 0.0
        %531 = vmatprep.subr.mxu0 0.0
        %532 = vmatpush1.msra.mxu0 0.0
        %533 = vmatprep.subr.mxu0 0.0
        %534 = vmatpush1.msra.mxu0 0.0
        %535 = vmatprep.subr.mxu0 0.0
        %536 = vmatpush1.msra.mxu0 0.0
        %537 = vmatprep.subr.mxu0 0.0
        %538 = vmatpush1.msra.mxu0 0.0
        %539 = vmatprep.subr.mxu0 0.0
        %540 = vmatpush1.msra.mxu0 0.0
        %541 = vmatprep.subr.mxu0 0.0
        %542 = vmatpush1.msra.mxu0 0.0
        %543 = vmatprep.subr.mxu0 0.0
        %544 = vmatpush1.msra.mxu0 0.0
        %545 = vmatprep.subr.mxu0 0.0
        %546 = vmatpush1.msra.mxu0 0.0
        %547 = vmatprep.subr.mxu0 0.0
        %548 = vmatpush1.msra.mxu0 0.0
        %549 = vmatprep.subr.mxu0 0.0
        %550 = vmatpush1.msra.mxu0 0.0
        %551 = vmatprep.subr.mxu0 0.0
        %552 = vmatpush1.msra.mxu0 0.0
        %553 = vmatprep.subr.mxu0 0.0
        %554 = vmatpush1.msra.mxu0 0.0
        %555 = vmatprep.subr.mxu0 0.0
        %556 = vmatpush1.msra.mxu0 0.0
        %557 = vmatprep.subr.mxu0 0.0
        %558 = vmatpush1.msra.mxu0 0.0
        %559 = vmatprep.subr.mxu0 0.0
        %560 = vmatpush1.msra.mxu0 0.0
        %561 = vmatprep.subr.mxu0 0.0
        %562 = vmatpush1.msra.mxu0 0.0
        %563 = vmatprep.subr.mxu0 0.0
        %564 = vmatpush1.msra.mxu0 0.0
        %565 = vmatprep.subr.mxu0 0.0
        %566 = vmatpush1.msra.mxu0 0.0
        %567 = vmatprep.subr.mxu0 0.0
        %568 = vmatpush1.msra.mxu0 0.0
        %569 = vmatprep.subr.mxu0 0.0
        %570 = vmatpush1.msra.mxu0 0.0
        %571 = vmatprep.subr.mxu0 0.0
        %572 = vmatpush1.msra.mxu0 0.0
        %573 = vmatprep.subr.mxu0 0.0
        %574 = vmatpush1.msra.mxu0 0.0
        %575 = vmatprep.subr.mxu0 0.0
        %576 = vmatpush1.msra.mxu0 0.0
        %577 = vmatprep.subr.mxu0 0.0
        %578 = vmatpush1.msra.mxu0 0.0
        %579 = vmatprep.subr.mxu0 0.0
        %580 = vmatpush1.msra.mxu0 0.0
        %581 = vmatprep.subr.mxu0 0.0
        %582 = vmatpush1.msra.mxu0 0.0
        %583 = vmatprep.subr.mxu0 0.0
        %584 = vmatpush1.msra.mxu0 0.0
        %585 = vmatprep.subr.mxu0 0.0
        %586 = vmatpush1.msra.mxu0 0.0
        %587 = vmatprep.mubr.f32.mxu0 0.0
        %588 = vmatmul.mubr.f32.gmra.mrb[0].mxu0 %v521
        %v589 = vpop.f32.mrb[0].mxu0
        %v590 = vadd.f32 %v518, %v589
        %v591 = vpop.f32.mrb[0].mxu0
        %v592 = vadd.f32 %v518, %v591
        %593 = vdwg.mxu0
        %v595 = vcombine.high %v423, %v423
        %v597 = vadd.f32 %v590, %v423
        %v598 = vadd.f32 %v592, %v595
        %v599 = vld [vmem:[%s6] sm:$0xf]
        %v600 = vld [vmem:[%s7] sm:$0xf]
        %602 = vset.pattern.permute.xlu0 0
        %603 = vperm.xlu0 %602, %v600
        %v604 = vpop.permute.xlu0 %603
        %vm606 = vcmask 23552
        %v608 = vsel %vm606, %v599, 0
        %vm610 = vcmask 1042432
        %v612 = vsel %vm610, %v597, 0
        %v615 = vsel %vm610, %v598, 0
        %617 = vmatprep.subr.mxu0 %v615
        %618 = vmatpush1.msra.mxu0 %v612
        %619 = vmatprep.subr.mxu0 0.0
        %620 = vmatpush1.msra.mxu0 0.0
        %621 = vmatprep.subr.mxu0 0.0
        %622 = vmatpush1.msra.mxu0 0.0
        %623 = vmatprep.subr.mxu0 0.0
        %624 = vmatpush1.msra.mxu0 0.0
        %625 = vmatprep.subr.mxu0 0.0
        %626 = vmatpush1.msra.mxu0 0.0
        %627 = vmatprep.subr.mxu0 0.0
        %628 = vmatpush1.msra.mxu0 0.0
        %629 = vmatprep.subr.mxu0 0.0
        %630 = vmatpush1.msra.mxu0 0.0
        %631 = vmatprep.subr.mxu0 0.0
        %632 = vmatpush1.msra.mxu0 0.0
        %633 = vmatprep.subr.mxu0 0.0
        %634 = vmatpush1.msra.mxu0 0.0
        %635 = vmatprep.subr.mxu0 0.0
        %636 = vmatpush1.msra.mxu0 0.0
        %637 = vmatprep.subr.mxu0 0.0
        %638 = vmatpush1.msra.mxu0 0.0
        %639 = vmatprep.subr.mxu0 0.0
        %640 = vmatpush1.msra.mxu0 0.0
        %641 = vmatprep.subr.mxu0 0.0
        %642 = vmatpush1.msra.mxu0 0.0
        %643 = vmatprep.subr.mxu0 0.0
        %644 = vmatpush1.msra.mxu0 0.0
        %645 = vmatprep.subr.mxu0 0.0
        %646 = vmatpush1.msra.mxu0 0.0
        %647 = vmatprep.subr.mxu0 0.0
        %648 = vmatpush1.msra.mxu0 0.0
        %649 = vmatprep.subr.mxu0 0.0
        %650 = vmatpush1.msra.mxu0 0.0
        %651 = vmatprep.subr.mxu0 0.0
        %652 = vmatpush1.msra.mxu0 0.0
        %653 = vmatprep.subr.mxu0 0.0
        %654 = vmatpush1.msra.mxu0 0.0
        %655 = vmatprep.subr.mxu0 0.0
        %656 = vmatpush1.msra.mxu0 0.0
        %657 = vmatprep.subr.mxu0 0.0
        %658 = vmatpush1.msra.mxu0 0.0
        %659 = vmatprep.subr.mxu0 0.0
        %660 = vmatpush1.msra.mxu0 0.0
        %661 = vmatprep.subr.mxu0 0.0
        %662 = vmatpush1.msra.mxu0 0.0
        %663 = vmatprep.subr.mxu0 0.0
        %664 = vmatpush1.msra.mxu0 0.0
        %665 = vmatprep.subr.mxu0 0.0
        %666 = vmatpush1.msra.mxu0 0.0
        %667 = vmatprep.subr.mxu0 0.0
        %668 = vmatpush1.msra.mxu0 0.0
        %669 = vmatprep.subr.mxu0 0.0
        %670 = vmatpush1.msra.mxu0 0.0
        %671 = vmatprep.subr.mxu0 0.0
        %672 = vmatpush1.msra.mxu0 0.0
        %673 = vmatprep.subr.mxu0 0.0
        %674 = vmatpush1.msra.mxu0 0.0
        %675 = vmatprep.subr.mxu0 0.0
        %676 = vmatpush1.msra.mxu0 0.0
        %677 = vmatprep.subr.mxu0 0.0
        %678 = vmatpush1.msra.mxu0 0.0
        %679 = vmatprep.subr.mxu0 0.0
        %680 = vmatpush1.msra.mxu0 0.0
        %681 = vmatprep.mubr.f32.mxu0 0.0
        %682 = vmatmul.mubr.f32.gmra.mrb[0].mxu0 %v608
        %v683 = vpop.f32.mrb[0].mxu0
        %v684 = vadd.f32 %v604, %v683
        %v685 = vpop.f32.mrb[0].mxu0
        %v686 = vadd.f32 %v604, %v685
        %687 = vdwg.mxu0
        %v688 = vxor.u32 %v684, 2147483648
        %v689 = vxor.u32 %v686, 2147483648
        %v690 = vmul.f32 %v688, 1.442695
        %v691 = vpow.pop %v690
        %v692 = vmul.f32 %v689, 1.442695
        %v693 = vpow.pop %v692
        %v694 = vadd.f32 %v691, 1.0
        %v695 = vadd.f32 %v693, 1.0
        %v696 = vrcp.pop %v694
        %v697 = vmul.f32 1.0, %v696
        %v698 = vrcp.pop %v695
        %v699 = vmul.f32 1.0, %v698
        %v700 = vmul.f32 %v509, %v697
        %v701 = vmul.f32 %v511, %v699
        %v703 = vadd.f32 %v700, %v422
        %v704 = vadd.f32 %v701, %v432
        %v707 = vcombine.low %v703, %v704
        %709 = vst [vmem:[%s379] sm:$0xff] %v707
        %v710 = vcombine.low %v597, %v598
        %712 = vst [vmem:[%s420] sm:$0x77] %v710
        %s713 = sand.u32 %s228, 1
        %s714 = scalar_lea.sflag [#allocation3], %s713
        %s715 = sand.u32 %s228, 1
        %s716 = smul.addr %s715, 8
        %s717 = scalar_lea.vmem [#allocation2], %s716
        %s718 = smul.u32 2, %s29
        %p719 = scmp.lt.s32.totalorder %s28, 1
        %s720 = scalar_select %p719, %s28, 1
        %p721 = scmp.lt.s32.totalorder %s718, 1
        %s722 = scalar_select %p721, %s718, 1
        %s723 = smul.addr %s720, 2
        %s724 = sadd.s32 %s722, %s723
        %s725 = smul.addr %s724, 4
        %s726 = scalar_lea.vmem %s9, %s725
        // Predicated region
        $region53: #{tpu_custom_call.1} parent=51 // pred_check
          %p727 = pneg %p238
        $region54: #{tpu_custom_call.1} parent=51 // pred_check_branch
          %729 = sbr.rel (%p727) target = $region56
        $region55: #{tpu_custom_call.1} parent=51 // pred_region
          %s730 = smul.u32 2, %s29
          %s732 = ssub.s32 128, 128
          %733 = vsyncadd %s714, %s732
          %s734 = smul.addr %s28, 2
          %s735 = sadd.s32 %s730, %s734
          %s736 = smul.addr %s735, 64
          %s737 = scalar_lea.hbm %s8, %s736
          %s739 = sshll.u32 %s717, 4
          %s740 = int_to_ptr.vmem [resolvable:$true] %s739
          %742 = dma.vmem_to_hbm [thread:$0]  %s740, 128, %s737, %s714
        $region56: #{tpu_custom_call.1} parent=51 // pred_fallthru
          _
        // Predicated region
        $region57: #{tpu_custom_call.1} parent=51 // pred_check
          %p743 = pneg %p266
        $region58: #{tpu_custom_call.1} parent=51 // pred_check_branch
          %745 = sbr.rel (%p743) target = $region60
        $region59: #{tpu_custom_call.1} parent=51 // pred_region
          %s746 = smul.u32 2, %s29
        $region60: #{tpu_custom_call.1} parent=51 // pred_fallthru
          _
      $region52: #{tpu_custom_call.1} parent=5 // pred_fallthru
        _
      %p747 = scmp.le.s32.totalorder 2, %s19
      // Predicated region
      $region61: #{tpu_custom_call.1} parent=5 // pred_check
        %p748 = pneg %p747
      $region62: #{tpu_custom_call.1} parent=5 // pred_check_branch
        %750 = sbr.rel (%p748) target = $region64
      $region63: #{tpu_custom_call.1} parent=5 // pred_region
        %s751 = ssub.s32 %s19, 2
        // Predicated region
        $region65: #{tpu_custom_call.1} parent=63 // pred_check
          %p752 = pneg %p244
        $region66: #{tpu_custom_call.1} parent=63 // pred_check_branch
          %754 = sbr.rel (%p752) target = $region68
        $region67: #{tpu_custom_call.1} parent=63 // pred_region
          %s755 = sand.u32 %s229, 1
          %s756 = scalar_lea.sflag [#allocation3], %s755
          %s757 = sand.u32 %s229, 1
          %s758 = smul.addr %s757, 8
          %s759 = scalar_lea.vmem [#allocation2], %s758
          %760 = dma.done %s756, 128
        $region68: #{tpu_custom_call.1} parent=63 // pred_fallthru
          _
        // Predicated region
        $region69: #{tpu_custom_call.1} parent=63 // pred_check
          %p761 = pneg %p272
        $region70: #{tpu_custom_call.1} parent=63 // pred_check_branch
          %763 = sbr.rel (%p761) target = $region72
        $region71: #{tpu_custom_call.1} parent=63 // pred_region
          %s764 = smul.u32 2, %s31
          %p765 = scmp.lt.s32.totalorder %s30, 1
          %s766 = scalar_select %p765, %s30, 1
          %p767 = scmp.lt.s32.totalorder %s764, 1
          %s768 = scalar_select %p767, %s764, 1
          %s769 = smul.addr %s766, 2
          %s770 = sadd.s32 %s768, %s769
          %s771 = smul.addr %s770, 4
          %s772 = scalar_lea.vmem %s9, %s771
        $region72: #{tpu_custom_call.1} parent=63 // pred_fallthru
          _
      $region64: #{tpu_custom_call.1} parent=5 // pred_fallthru
        _
    $region6: #{tpu_custom_call.1} parent=1 // loop_footer
      %s23 = sadd.s32 1, %s19
    $region7: #{tpu_custom_call.1} parent=1 // loop_footer_branch
      %18 = sbr.rel target = $region3
    $region8: #{tpu_custom_call.1} parent=1 // loop_exit
      _
    %773 = vsyncpa [#allocation3], 1
    %s774 = scalar_lea.sflag [#allocation3], 1
    %775 = vsyncpa %s774, 1

</llo_original>
